<compile_context>
chip_gen: v5e
topology: v5e:2x2
jax: 0.10.0
libtpu: 0.0.40
codegen_flags: <defaults>
</compile_context>

<pallas_src>
import jax
import jax.numpy as jnp
from jax.experimental import pallas as pl
from jax.experimental.pallas import tpu as pltpu


def _round_up(n, m):
    return ((n + m - 1) // m) * m


def _make_kernel(vocabs, dims):
    """Per batch-tile: gather every field's rows and write one fused slab."""

    def kernel(idx_ref, *refs):
        out_ref = refs[-1]            # (TB, sum(D_f)) VMEM output tile
        table_refs = refs[:-1]        # per field: (V_f, D_f) VMEM-resident table
        idx = idx_ref[...]            # (TB, F) int32
        tb = idx.shape[0]

        pieces = []
        for f, (v, d) in enumerate(zip(vocabs, dims)):
            col = idx[:, f:f + 1]                                   # (TB, 1)
            iota = jax.lax.broadcasted_iota(jnp.int32, (tb, v), 1)  # (TB, V_f)
            onehot = (col == iota).astype(jnp.float32)              # exact 0/1
            # one-hot @ table is an exact row gather (single 1.0 per row).
            pieces.append(
                jnp.dot(onehot, table_refs[f][...],
                        preferred_element_type=jnp.float32))        # (TB, D_f)

        # Single wide lane-concatenated store per tile.
        out_ref[...] = jnp.concatenate(pieces, axis=1).astype(out_ref.dtype)

    return kernel


@jax.jit
def deep_features_embedding(x, tables):
    """Forward pass of DeepFeaturesEmbedding.

    x      : (batch, num_fields) integer array
    tables : list of (vocab_f + 1, dim_f) float32 arrays
    returns: (batch, sum(dim_f)) float32
    """
    B, F = x.shape
    assert F == len(tables)
    dims = [int(t.shape[1]) for t in tables]
    vocabs = [int(t.shape[0]) for t in tables]
    total_dim = sum(dims)

    # Clamp ids to the valid range (PyTorch nn.Embedding would error on OOB ids;
    # clamping keeps stray ids safe and matches the previous version's behavior).
    max_idx = jnp.asarray([v - 1 for v in vocabs], dtype=jnp.int32)
    idx = jnp.clip(x.astype(jnp.int32), 0, max_idx[None, :])

    # Batch tile: multiple of 8 sublanes, up to 256 rows per grid step.
    TB = min(256, _round_up(B, 8))
    B_pad = _round_up(B, TB)
    if B_pad != B:
        idx = jnp.pad(idx, ((0, B_pad - B), (0, 0)))

    # Indices: (TB, F) VMEM tile per step.  Tables: full-block, constant block
    # index -> DMA'd once, resident in VMEM across all batch tiles.
    in_specs = [pl.BlockSpec((TB, F), lambda i: (i, 0))]
    in_specs += [pl.BlockSpec(t.shape, lambda i: (0, 0)) for t in tables]
    out_specs = pl.BlockSpec((TB, total_dim), lambda i: (i, 0))

    # VMEM budget: resident tables + double-buffered idx/out tiles (+ slack).
    table_bytes = sum(v * d * 4 for v, d in zip(vocabs, dims))
    tile_bytes = TB * (F + total_dim) * 4
    vmem_limit = int(min(max(2 * (table_bytes + tile_bytes) + (4 << 20),
                             32 << 20),
                         60 << 20))

    out = pl.pallas_call(
        _make_kernel(tuple(vocabs), tuple(dims)),
        out_shape=jax.ShapeDtypeStruct((B_pad, total_dim), jnp.float32),
        grid=(B_pad // TB,),
        in_specs=in_specs,
        out_specs=out_specs,
        compiler_params=pltpu.CompilerParams(
            dimension_semantics=("parallel",),
            vmem_limit_bytes=vmem_limit),
    )(idx, *tables)

    return out[:B]


def init_tables(key, deep_feature_ranges, deep_embed_dims):
    """Xavier-normal init, matching nn.init.xavier_normal_ on (V+1, D) weights."""
    tables = []
    keys = jax.random.split(key, len(deep_feature_ranges))
    for k, rng, dim in zip(keys, deep_feature_ranges, deep_embed_dims):
        vocab = rng + 1
        std = (2.0 / (vocab + dim)) ** 0.5
        tables.append(std * jax.random.normal(k, (vocab, dim), dtype=jnp.float32))
    return tables


if __name__ == "__main__":
    key = jax.random.PRNGKey(0)
    k_tab, k_idx = jax.random.split(key)

    # small synthetic config: 3 categorical fields
    deep_feature_ranges = [10, 20, 15]      # max category id per field
    deep_embed_dims = [8, 16, 8]            # embedding dim per field
    batch = 8

    tables = init_tables(k_tab, deep_feature_ranges, deep_embed_dims)

    # integer features, field i in [0, range_i]
    idx_keys = jax.random.split(k_idx, len(deep_feature_ranges))
    cols = [
        jax.random.randint(ik, (batch, 1), 0, rng + 1, dtype=jnp.int32)
        for ik, rng in zip(idx_keys, deep_feature_ranges)
    ]
    x = jnp.concatenate(cols, axis=1)       # (batch, num_fields)

    out = deep_features_embedding(x, tables)
    out = jax.block_until_ready(out)

    # reference check: plain JAX gather + concat
    ref = jnp.concatenate(
        [tables[i][x[:, i]] for i in range(len(tables))], axis=1
    )
    assert out.shape == (batch, sum(deep_embed_dims)), out.shape
    assert jnp.allclose(out, ref, atol=1e-5), "mismatch vs reference gather"

    print("KERNEL_OK")
</pallas_src>

<mosaic_0001>
module attributes {stable_mosaic.version = 11 : i64} {
  func.func @kernel(%arg0: i32, %arg1: memref<8x3xi32, #tpu.memory_space<vmem>>, %arg2: memref<11x8xf32, #tpu.memory_space<vmem>>, %arg3: memref<21x16xf32, #tpu.memory_space<vmem>>, %arg4: memref<16x8xf32, #tpu.memory_space<vmem>>, %arg5: memref<8x32xf32, #tpu.memory_space<vmem>>) attributes {dimension_semantics = [#tpu.dimension_semantics<parallel>], iteration_bounds = array<i64: 1>, scalar_prefetch = 0 : i64, scratch_operands = 0 : i64, tpu.core_type = #tpu.core_type<tc>, window_params = [{transform_indices = @transform_0, window_bounds = array<i64: 8, 3>}, {pipeline_mode = #tpu.pipeline_mode<synchronous>, transform_indices = @transform_1, window_bounds = array<i64: 11, 8>}, {pipeline_mode = #tpu.pipeline_mode<synchronous>, transform_indices = @transform_2, window_bounds = array<i64: 21, 16>}, {pipeline_mode = #tpu.pipeline_mode<synchronous>, transform_indices = @transform_3, window_bounds = array<i64: 16, 8>}, {transform_indices = @transform_4, window_bounds = array<i64: 8, 32>}]} {
    %c0 = arith.constant 0 : index
    %c0_0 = arith.constant 0 : index
    %0 = vector.load %arg1[%c0, %c0_0] : memref<8x3xi32, #tpu.memory_space<vmem>>, vector<8x3xi32>
    %1 = vector.extract_strided_slice %0 {offsets = [0, 0], sizes = [8, 1], strides = [1, 1]} : vector<8x3xi32> to vector<8x1xi32>
    %2 = tpu.iota {dimensions = array<i32: 1>} : vector<8x11xi32>
    %3 = vector.broadcast %1 : vector<8x1xi32> to vector<8x11xi32>
    %4 = arith.cmpi eq, %3, %2 : vector<8x11xi32>
    %5 = arith.extui %4 : vector<8x11xi1> to vector<8x11xi32>
    %6 = arith.sitofp %5 : vector<8x11xi32> to vector<8x11xf32>
    %c0_1 = arith.constant 0 : index
    %c0_2 = arith.constant 0 : index
    %7 = vector.load %arg2[%c0_1, %c0_2] : memref<11x8xf32, #tpu.memory_space<vmem>>, vector<11x8xf32>
    %cst = arith.constant dense<0.000000e+00> : vector<8x8xf32>
    %8 = tpu.matmul %6, %7, %cst {dimension_numbers = #tpu.dot_dimension_numbers<[1], [0], [0], [1], [0, 0, 1, 1], [], []>} : vector<8x11xf32>, vector<11x8xf32>, vector<8x8xf32> -> vector<8x8xf32>
    %9 = vector.extract_strided_slice %0 {offsets = [0, 1], sizes = [8, 1], strides = [1, 1]} : vector<8x3xi32> to vector<8x1xi32>
    %10 = tpu.iota {dimensions = array<i32: 1>} : vector<8x21xi32>
    %11 = vector.broadcast %9 : vector<8x1xi32> to vector<8x21xi32>
    %12 = arith.cmpi eq, %11, %10 : vector<8x21xi32>
    %13 = arith.extui %12 : vector<8x21xi1> to vector<8x21xi32>
    %14 = arith.sitofp %13 : vector<8x21xi32> to vector<8x21xf32>
    %c0_3 = arith.constant 0 : index
    %c0_4 = arith.constant 0 : index
    %15 = vector.load %arg3[%c0_3, %c0_4] : memref<21x16xf32, #tpu.memory_space<vmem>>, vector<21x16xf32>
    %cst_5 = arith.constant dense<0.000000e+00> : vector<8x16xf32>
    %16 = tpu.matmul %14, %15, %cst_5 {dimension_numbers = #tpu.dot_dimension_numbers<[1], [0], [0], [1], [0, 0, 1, 1], [], []>} : vector<8x21xf32>, vector<21x16xf32>, vector<8x16xf32> -> vector<8x16xf32>
    %17 = vector.extract_strided_slice %0 {offsets = [0, 2], sizes = [8, 1], strides = [1, 1]} : vector<8x3xi32> to vector<8x1xi32>
    %18 = tpu.iota {dimensions = array<i32: 1>} : vector<8x16xi32>
    %19 = vector.broadcast %17 : vector<8x1xi32> to vector<8x16xi32>
    %20 = arith.cmpi eq, %19, %18 : vector<8x16xi32>
    %21 = arith.extui %20 : vector<8x16xi1> to vector<8x16xi32>
    %22 = arith.sitofp %21 : vector<8x16xi32> to vector<8x16xf32>
    %c0_6 = arith.constant 0 : index
    %c0_7 = arith.constant 0 : index
    %23 = vector.load %arg4[%c0_6, %c0_7] : memref<16x8xf32, #tpu.memory_space<vmem>>, vector<16x8xf32>
    %cst_8 = arith.constant dense<0.000000e+00> : vector<8x8xf32>
    %24 = tpu.matmul %22, %23, %cst_8 {dimension_numbers = #tpu.dot_dimension_numbers<[1], [0], [0], [1], [0, 0, 1, 1], [], []>} : vector<8x16xf32>, vector<16x8xf32>, vector<8x8xf32> -> vector<8x8xf32>
    %25 = tpu.concatenate %8, %16, %24 in 1 : vector<8x8xf32>, vector<8x16xf32>, vector<8x8xf32> -> vector<8x32xf32>
    %c0_9 = arith.constant 0 : index
    %c0_10 = arith.constant 0 : index
    %26 = vector.load %arg5[%c0_9, %c0_10] : memref<8x32xf32, #tpu.memory_space<vmem>>, vector<8x32xf32>
    tpu.vector_store %arg5[%c0_9, %c0_10], %25 {strides = array<i32>} : memref<8x32xf32, #tpu.memory_space<vmem>>, vector<8x32xf32>,
    return
  }
  func.func @transform_0(%arg0: i32) -> (i32, i32) {
    %c0_i32 = arith.constant 0 : i32
    %c0_i32_0 = arith.constant 0 : i32
    return %arg0, %c0_i32 : i32, i32
  }
  func.func @transform_1(%arg0: i32) -> (i32, i32) {
    %c0_i32 = arith.constant 0 : i32
    %c0_i32_0 = arith.constant 0 : i32
    %c0_i32_1 = arith.constant 0 : i32
    return %c0_i32, %c0_i32_0 : i32, i32
  }
  func.func @transform_2(%arg0: i32) -> (i32, i32) {
    %c0_i32 = arith.constant 0 : i32
    %c0_i32_0 = arith.constant 0 : i32
    %c0_i32_1 = arith.constant 0 : i32
    return %c0_i32, %c0_i32_0 : i32, i32
  }
  func.func @transform_3(%arg0: i32) -> (i32, i32) {
    %c0_i32 = arith.constant 0 : i32
    %c0_i32_0 = arith.constant 0 : i32
    %c0_i32_1 = arith.constant 0 : i32
    return %c0_i32, %c0_i32_0 : i32, i32
  }
  func.func @transform_4(%arg0: i32) -> (i32, i32) {
    %c0_i32 = arith.constant 0 : i32
    %c0_i32_0 = arith.constant 0 : i32
    return %arg0, %c0_i32 : i32, i32
  }
}

</mosaic_0001>

<llo_original>
// kernel: deep_features_embedding.1
$region0: #{deep_features_embedding.1}
  #allocation0 [shape = 'u32[]', space=smem, size = 0x4, offset = 0x4, fixed_abs, tag = 'smem constant byte address 0x4 - core index']
  #allocation1 [shape = 'u32[72,128]{1,0:T(1,128)}', space=vmem, size = 0x9000, scoped, tag = 'internal scratch']
  %s0 = inlined_call_operand.vmem [shape: s32[8,3], index: 0, kind: input, shape index: {}]
  %s1 = inlined_call_operand.vmem [shape: f32[11,8], index: 1, kind: input, shape index: {}]
  %s2 = inlined_call_operand.vmem [shape: f32[21,16], index: 2, kind: input, shape index: {}]
  %s3 = inlined_call_operand.vmem [shape: f32[16,8], index: 3, kind: input, shape index: {}]
  %s4 = inlined_call_operand.hbm [shape: f32[8,32], index: 4, kind: output, shape index: {}]
  %s5 = sld [smem:[#allocation0]]
  $region26: #{deep_features_embedding.1} parent=0
    _
  %s7 = ssub.s32 1, %s5
  %s8 = scalar_select 0, %s7, %s5
  $region1: #{deep_features_embedding.1} parent=0
    #allocation2 [shape = 'u8[4096]{0}', space=vmem, size = 0x1000, scoped, tag = 'output window, operand 0, single buffered']
    #allocation3 [shape = 's32[1]{0}', space=sflag, size = 0x4, scoped, tag = 'scoped memory for deep_features_embedding.1']
    %9 = vsyncpa [#allocation3], 0
    // Predicated region
    $region2: #{deep_features_embedding.1} parent=1 // pred_check
      _
    $region3: #{deep_features_embedding.1} parent=1 // pred_check_branch
      %11 = sbr.rel (0) target = $region5
    $region4: #{deep_features_embedding.1} parent=1 // pred_region
      _
    $region5: #{deep_features_embedding.1} parent=1 // pred_fallthru
      _
    // Predicated region
    $region6: #{deep_features_embedding.1} parent=1 // pred_check
      _
    $region7: #{deep_features_embedding.1} parent=1 // pred_check_branch
      %13 = sbr.rel (0) target = $region9
    $region8: #{deep_features_embedding.1} parent=1 // pred_region
      _
    $region9: #{deep_features_embedding.1} parent=1 // pred_fallthru
      _
    // Predicated region
    $region10: #{deep_features_embedding.1} parent=1 // pred_check
      _
    $region11: #{deep_features_embedding.1} parent=1 // pred_check_branch
      %15 = sbr.rel (0) target = $region13
    $region12: #{deep_features_embedding.1} parent=1 // pred_region
      _
    $region13: #{deep_features_embedding.1} parent=1 // pred_fallthru
      _
    // Predicated region
    $region14: #{deep_features_embedding.1} parent=1 // pred_check
      _
    $region15: #{deep_features_embedding.1} parent=1 // pred_check_branch
      %17 = sbr.rel (0) target = $region17
    $region16: #{deep_features_embedding.1} parent=1 // pred_region
      _
    $region17: #{deep_features_embedding.1} parent=1 // pred_fallthru
      _
    %v18 = vld [vmem:[%s0] sm:$0xff]
    %v19 = vlaneseq
    %v20 = vand.u32 %v19, 127
    %21 = vset.pattern.permute.xlu0 0
    %22 = vperm.xlu0 %21, %v18
    %v23 = vpop.permute.xlu0 %22
    %vm24 = vcmp.eq.s32.totalorder %v23, %v20
    %v25 = vsel %vm24, 1, 0
    %v26 = vcvt.s32.f32 %v25
    %v27 = vld [vmem:[%s1] sm:$0xff]
    %v28 = vld [vmem:[%s1 + $0x8] sm:$0x7]
    %vm29 = vcmask 89088
    %v31 = vsel %vm29, %v26, 0
    %vm33 = vcmask 1042432
    %v35 = vsel %vm33, %v28, 0
    %37 = vmatpush.msra.mxu0 0.0
    %38 = vmatpush.msra.mxu0 0.0
    %39 = vmatpush.msra.mxu0 0.0
    %40 = vmatpush.msra.mxu0 0.0
    %41 = vmatpush.msra.mxu0 0.0
    %42 = vmatpush.msra.mxu0 0.0
    %43 = vmatpush.msra.mxu0 0.0
    %44 = vmatpush.msra.mxu0 0.0
    %45 = vmatpush.msra.mxu0 0.0
    %46 = vmatpush.msra.mxu0 0.0
    %47 = vmatpush.msra.mxu0 0.0
    %48 = vmatpush.msra.mxu0 0.0
    %49 = vmatpush.msra.mxu0 0.0
    %50 = vmatpush.msra.mxu0 0.0
    %51 = vmatpush.msra.mxu0 %v35
    %52 = vmatpush.msra.mxu0 %v27
    %53 = vmatmul.f32.gmra.mxu0 %v31
    %v54 = vpop.f32.mrf.mxu0
    %v55 = vadd.f32 0.0, %v54
    %56 = vdwg.mxu0
    %57 = vset.pattern.permute.xlu0 1
    %58 = vperm.xlu0 %57, %v18
    %v59 = vpop.permute.xlu0 %58
    %vm60 = vcmp.eq.s32.totalorder %v59, %v20
    %v61 = vsel %vm60, 1, 0
    %v62 = vcvt.s32.f32 %v61
    %v63 = vld [vmem:[%s2] sm:$0xff]
    %v64 = vld [vmem:[%s2 + $0x8] sm:$0xff]
    %v65 = vld [vmem:[%s2 + $0x10] sm:$0x1f]
    %vm66 = vcmask 171008
    %v68 = vsel %vm66, %v62, 0
    %vm70 = vcmask 1044480
    %v72 = vsel %vm70, %v65, 0
    %74 = vmatpush.msra.mxu0 0.0
    %75 = vmatpush.msra.mxu0 0.0
    %76 = vmatpush.msra.mxu0 0.0
    %77 = vmatpush.msra.mxu0 0.0
    %78 = vmatpush.msra.mxu0 0.0
    %79 = vmatpush.msra.mxu0 0.0
    %80 = vmatpush.msra.mxu0 0.0
    %81 = vmatpush.msra.mxu0 0.0
    %82 = vmatpush.msra.mxu0 0.0
    %83 = vmatpush.msra.mxu0 0.0
    %84 = vmatpush.msra.mxu0 0.0
    %85 = vmatpush.msra.mxu0 0.0
    %86 = vmatpush.msra.mxu0 0.0
    %87 = vmatpush.msra.mxu0 %v72
    %88 = vmatpush.msra.mxu0 %v64
    %89 = vmatpush.msra.mxu0 %v63
    %90 = vmatmul.f32.gmra.mxu0 %v68
    %v91 = vpop.f32.mrf.mxu0
    %v92 = vadd.f32 0.0, %v91
    %93 = vdwg.mxu0
    %94 = vset.pattern.permute.xlu0 2
    %95 = vperm.xlu0 %94, %v18
    %v96 = vpop.permute.xlu0 %95
    %vm97 = vcmp.eq.s32.totalorder %v96, %v20
    %v98 = vsel %vm97, 1, 0
    %v99 = vcvt.s32.f32 %v98
    %v100 = vld [vmem:[%s3] sm:$0xff]
    %v101 = vld [vmem:[%s3 + $0x8] sm:$0xff]
    %vm102 = vcmask 130048
    %v104 = vsel %vm102, %v99, 0
    %106 = vmatpush.msra.mxu0 0.0
    %107 = vmatpush.msra.mxu0 0.0
    %108 = vmatpush.msra.mxu0 0.0
    %109 = vmatpush.msra.mxu0 0.0
    %110 = vmatpush.msra.mxu0 0.0
    %111 = vmatpush.msra.mxu0 0.0
    %112 = vmatpush.msra.mxu0 0.0
    %113 = vmatpush.msra.mxu0 0.0
    %114 = vmatpush.msra.mxu0 0.0
    %115 = vmatpush.msra.mxu0 0.0
    %116 = vmatpush.msra.mxu0 0.0
    %117 = vmatpush.msra.mxu0 0.0
    %118 = vmatpush.msra.mxu0 0.0
    %119 = vmatpush.msra.mxu0 0.0
    %120 = vmatpush.msra.mxu0 %v101
    %121 = vmatpush.msra.mxu0 %v100
    %122 = vmatmul.f32.gmra.mxu0 %v104
    %v123 = vpop.f32.mrf.mxu0
    %v124 = vadd.f32 0.0, %v123
    %125 = vdwg.mxu0
    %127 = vrot.lane.b32.xlu0 %v92, 8
    %v128 = vpop.permute.xlu0 %127
    %131 = vrot.lane.b32.xlu0 %v124, 24
    %v132 = vpop.permute.xlu0 %131
    %vm134 = vcmask 64512
    %v135 = vsel %vm134, %v55, %v128
    %vm136 = vcmask 195584
    %v137 = vsel %vm136, %v135, %v132
    %vm138 = vcmask 261120
    %139 = vst.msk [vmem:[#allocation2] sm:$0xff] %vm138, %v137
    // Predicated region
    $region18: #{deep_features_embedding.1} parent=1 // pred_check
      _
    $region19: #{deep_features_embedding.1} parent=1 // pred_check_branch
      %141 = sbr.rel (0) target = $region21
    $region20: #{deep_features_embedding.1} parent=1 // pred_region
      %143 = vsyncadd [#allocation3], 0
      %s145 = sshll.u32 [#allocation2], 4
      %s146 = int_to_ptr.vmem [resolvable:$true] %s145
      %s147 = sshll.u32 %s4, 4
      %s148 = int_to_ptr.hbm [resolvable:$true] %s147
      %150 = dma.vmem_to_hbm [thread:$0]  %s146, 128, %s148, [#allocation3]
    $region21: #{deep_features_embedding.1} parent=1 // pred_fallthru
      _
    // Predicated region
    $region22: #{deep_features_embedding.1} parent=1 // pred_check
      _
    $region23: #{deep_features_embedding.1} parent=1 // pred_check_branch
      %152 = sbr.rel (0) target = $region25
    $region24: #{deep_features_embedding.1} parent=1 // pred_region
      %154 = dma.done [#allocation3], 128
    $region25: #{deep_features_embedding.1} parent=1 // pred_fallthru
      _
    %155 = vsyncpa [#allocation3], 1

</llo_original>
